<compile_context>
chip_gen: v7x
topology: tpu7x:2x2x1
jax: 0.10.0
libtpu: 0.0.40
codegen_flags: <defaults>
</compile_context>

<pallas_src>
import math

import jax
import jax.numpy as jnp
from jax import lax
from jax.experimental import pallas as pl
from jax.experimental.pallas import tpu as pltpu


# ------------------------------ helpers -----------------------------------------
def _pick_tile(dim, target, align):
    """Largest multiple of `align` that divides `dim` and is <= target, else full dim."""
    if dim <= target:
        return dim
    t = (target // align) * align
    while t >= align:
        if dim % t == 0:
            return t
        t -= align
    return dim


def _vmem_limit_bytes(estimate_bytes, *, ceiling=48 * 1024 * 1024, floor=4 * 1024 * 1024):
    """Honest scoped-VMEM limit derived from the tile footprint (+50% headroom)."""
    if estimate_bytes > ceiling:
        raise ValueError(
            f"Pallas kernel tile working set (~{estimate_bytes / 2**20:.1f} MiB) exceeds the "
            f"{ceiling / 2**20:.0f} MiB VMEM budget; shrink tile sizes for this shape.")
    return int(max(floor, min(ceiling, estimate_bytes * 3 // 2)))


# ------------------------ fused QKV projection (bf16 GEMM) -----------------------
def _make_qkv_kernel(hidden):
    def kernel(x_ref, w_ref, b_ref, o_ref):
        # x: (tm, H) f32 -> bf16 in-kernel (avoids an extra HBM cast pass).
        x = x_ref[...].astype(jnp.bfloat16)
        # One wide MXU matmul over the full fused (H, 3H) bf16 weight; f32 accumulate.
        y = jnp.dot(x, w_ref[...], preferred_element_type=jnp.float32)        # (tm, 3H)
        # Split the Q | K | V column groups into the (3, tm, H) output block.
        # Each store is a full-H lane-dense row slab; for H % 128 == 0 the
        # column slices fall on whole lane tiles (no relayout).
        for t in range(3):
            o_ref[t] = (y[:, t * hidden:(t + 1) * hidden] + b_ref[t]).astype(o_ref.dtype)
    return kernel


def pallas_qkv_projection(x, w_qkv, b_qkv):
    """(x @ [Wq|Wk|Wv] + [bq|bk|bv]) emitted as a (3, M, H) bf16 intermediate.

    x:     (M, H)    float32
    w_qkv: (H, 3H)   bfloat16  (Q columns pre-scaled by 1/sqrt(head_dim))
    b_qkv: (3, 1, H) float32   (Q bias pre-scaled)
    """
    M, K = x.shape
    N3 = w_qkv.shape[1]
    H = N3 // 3
    tm = _pick_tile(M, 256, 8)

    est = (2 * tm * K * 4            # f32 input blocks (double-buffered)
           + 2 * K * N3 * 2          # resident bf16 fused weight (conservative x2)
           + 2 * 3 * H * 4           # bias
           + 2 * 3 * tm * H * 2      # bf16 output blocks
           + tm * N3 * 4)            # f32 matmul result
    return pl.pallas_call(
        _make_qkv_kernel(H),
        out_shape=jax.ShapeDtypeStruct((3, M, H), jnp.bfloat16),
        grid=(M // tm,),
        in_specs=[
            pl.BlockSpec((tm, K), lambda i: (i, 0)),
            pl.BlockSpec((K, N3), lambda i: (0, 0)),      # resident across the grid
            pl.BlockSpec((3, 1, H), lambda i: (0, 0, 0)),
        ],
        out_specs=pl.BlockSpec((3, tm, H), lambda i: (0, i, 0)),
        compiler_params=pltpu.CompilerParams(
            dimension_semantics=("parallel",),
            vmem_limit_bytes=_vmem_limit_bytes(est),
        ),
    )(x, w_qkv, b_qkv)


# ------------------------------ attention core ------------------------------------
def _make_attn_kernel(num_heads, head_dim):
    def kernel(q_ref, k_ref, v_ref, o_ref):
        # q_ref: (tq, H) bf16 (pre-scaled Q); k_ref/v_ref: (S, H) bf16; o_ref: (tq, H) f32.
        ctx_heads = []
        # Static head offsets keep every slice lane-static.
        # TODO(synk): for large num_heads, move heads onto an "arbitrary" grid axis over a
        #             head-major (3, nH, B, S, D) intermediate to bound live ranges.
        for h in range(num_heads):
            lo = h * head_dim
            hi = lo + head_dim
            q = q_ref[:, lo:hi]                                        # (tq, D) bf16
            k = k_ref[:, lo:hi]                                        # (S,  D) bf16
            v = v_ref[:, lo:hi]                                        # (S,  D) bf16
            # QK^T contracting on D (no materialized transpose); bf16 in, f32 out.
            s = lax.dot_general(q, k, (((1,), (1,)), ((), ())),
                                preferred_element_type=jnp.float32)    # (tq, S)
            # TODO(synk): K-tiled online-softmax (flash) inner loop once S grows beyond ~1-2K.
            # TODO(synk): on v6e/v7x the exp could run in bf16 to relieve the EUP.
            m = jnp.max(s, axis=-1, keepdims=True)
            p = jnp.exp(s - m)                                         # f32
            l = jnp.sum(p, axis=-1, keepdims=True)                     # (tq, 1) f32
            ctx = jnp.dot(p.astype(v.dtype), v,
                          preferred_element_type=jnp.float32)          # (tq, D) f32
            # Deferred softmax normalization on the small (tq, D) tile; EUP reciprocal.
            ctx_heads.append(ctx * pl.reciprocal(l, approx=True))
        # All heads assembled in registers -> ONE lane-dense full-width store per step.
        o_ref[...] = jnp.concatenate(ctx_heads, axis=-1).astype(o_ref.dtype)
    return kernel


def pallas_attention(qkv, num_heads):
    """qkv: (3, B, S, H) bf16 with Q pre-scaled.  Returns context (B, S, H) f32."""
    _, B, S, H = qkv.shape
    head_dim = H // num_heads
    tq = _pick_tile(S, 256, 8)

    est = (2 * tq * H * 2            # q blocks
           + 2 * 2 * S * H * 2       # k + v blocks (resident per batch)
           + 2 * tq * H * 4          # f32 output blocks
           + 4 * tq * S * 4          # per-head score/prob temporaries
           + 2 * tq * H * 4)         # context assembly
    return pl.pallas_call(
        _make_attn_kernel(num_heads, head_dim),
        out_shape=jax.ShapeDtypeStruct((B, S, H), jnp.float32),
        grid=(B, S // tq),
        in_specs=[
            pl.BlockSpec((None, None, tq, H), lambda b, qi: (0, b, qi, 0)),  # Q tile
            pl.BlockSpec((None, None, S, H), lambda b, qi: (1, b, 0, 0)),    # K (whole seq)
            pl.BlockSpec((None, None, S, H), lambda b, qi: (2, b, 0, 0)),    # V (whole seq)
        ],
        out_specs=pl.BlockSpec((None, tq, H), lambda b, qi: (b, qi, 0)),
        compiler_params=pltpu.CompilerParams(
            dimension_semantics=("parallel", "parallel"),
            vmem_limit_bytes=_vmem_limit_bytes(est),
        ),
    )(qkv, qkv, qkv)


# ------------------------------- module wrapper ------------------------------------
def prepare_params(params, num_heads):
    """One-time prep: fuse Q/K/V weights, fold 1/sqrt(D) into Q, cast weights to bf16."""
    H = params["wq"].shape[0]
    assert H % num_heads == 0, "hidden size must be divisible by num_attention_heads"
    scale = 1.0 / math.sqrt(H // num_heads)
    w_qkv = jnp.concatenate(
        [params["wq"] * scale, params["wk"], params["wv"]], axis=1).astype(jnp.bfloat16)
    b_qkv = jnp.stack(
        [params["bq"] * scale, params["bk"], params["bv"]]).reshape(3, 1, H).astype(jnp.float32)
    return {"w_qkv": w_qkv, "b_qkv": b_qkv}


def bert_self_attention(hidden_states, prepared, num_heads):
    """Forward pass of BertSelfAttention_new_1 (standard self-attention path).

    hidden_states: (B, S, H) float32.  Returns context_layer: (B, S, H) float32.
    # TODO(synk): attention_mask / head_mask / relative position embeddings /
    #             cross-attention / past_key_value paths are not implemented.
    """
    B, S, H = hidden_states.shape
    x2d = hidden_states.reshape(B * S, H)
    qkv = pallas_qkv_projection(x2d, prepared["w_qkv"], prepared["b_qkv"])   # (3, B*S, H) bf16
    qkv = qkv.reshape(3, B, S, H)                                            # free reshape
    return pallas_attention(qkv, num_heads)


# --------------------------------- reference ----------------------------------------
def reference_attention(hidden_states, params, num_heads):
    B, S, H = hidden_states.shape
    D = H // num_heads
    x2d = hidden_states.reshape(B * S, H)
    q = (x2d @ params["wq"] + params["bq"]).reshape(B, S, num_heads, D).transpose(0, 2, 1, 3)
    k = (x2d @ params["wk"] + params["bk"]).reshape(B, S, num_heads, D).transpose(0, 2, 1, 3)
    v = (x2d @ params["wv"] + params["bv"]).reshape(B, S, num_heads, D).transpose(0, 2, 1, 3)
    scores = jnp.einsum("bhqd,bhkd->bhqk", q, k) / math.sqrt(D)
    probs = jax.nn.softmax(scores, axis=-1)
    ctx = jnp.einsum("bhqk,bhkd->bhqd", probs, v)
    return ctx.transpose(0, 2, 1, 3).reshape(B, S, H)


if __name__ == "__main__":
    B, S, H, nH = 2, 8, 32, 4

    key = jax.random.PRNGKey(0)
    k_x, k_wq, k_wk, k_wv, k_bq, k_bk, k_bv = jax.random.split(key, 7)

    hidden_states = jax.random.normal(k_x, (B, S, H), dtype=jnp.float32)

    # nn.Linear weight is (out, in); we store (in, out) so the kernel does x @ W + b.
    init = 1.0 / math.sqrt(H)
    params = {
        "wq": jax.random.uniform(k_wq, (H, H), jnp.float32, -init, init),
        "wk": jax.random.uniform(k_wk, (H, H), jnp.float32, -init, init),
        "wv": jax.random.uniform(k_wv, (H, H), jnp.float32, -init, init),
        "bq": jax.random.uniform(k_bq, (H,), jnp.float32, -init, init),
        "bk": jax.random.uniform(k_bk, (H,), jnp.float32, -init, init),
        "bv": jax.random.uniform(k_bv, (H,), jnp.float32, -init, init),
    }

    prepared = prepare_params(params, nH)          # one-time fusion (not per forward call)

    out = bert_self_attention(hidden_states, prepared, nH)
    out = jax.block_until_ready(out)

    ref = reference_attention(hidden_states, params, nH)
    assert out.shape == (B, S, H)
    # bf16 matmul operands + approx reciprocal -> relaxed tolerance vs the f32 reference.
    assert jnp.allclose(out, ref, atol=2e-2, rtol=2e-2), float(jnp.max(jnp.abs(out - ref)))

    print("KERNEL_OK")
</pallas_src>

<mosaic_0001>
module attributes {stable_mosaic.version = 11 : i64} {
  func.func @kernel(%arg0: i32, %arg1: memref<16x32xf32, #tpu.memory_space<vmem>>, %arg2: memref<32x96xbf16, #tpu.memory_space<vmem>>, %arg3: memref<3x1x32xf32, #tpu.memory_space<vmem>>, %arg4: memref<3x16x32xbf16, #tpu.memory_space<vmem>>) attributes {dimension_semantics = [#tpu.dimension_semantics<parallel>], iteration_bounds = array<i64: 1>, scalar_prefetch = 0 : i64, scratch_operands = 0 : i64, tpu.core_type = #tpu.core_type<tc>, window_params = [{transform_indices = @transform_0, window_bounds = array<i64: 16, 32>}, {pipeline_mode = #tpu.pipeline_mode<synchronous>, transform_indices = @transform_1, window_bounds = array<i64: 32, 96>}, {pipeline_mode = #tpu.pipeline_mode<synchronous>, transform_indices = @transform_2, window_bounds = array<i64: 3, 1, 32>}, {transform_indices = @transform_3, window_bounds = array<i64: 3, 16, 32>}]} {
    %c0 = arith.constant 0 : index
    %c0_0 = arith.constant 0 : index
    %0 = vector.load %arg1[%c0, %c0_0] : memref<16x32xf32, #tpu.memory_space<vmem>>, vector<16x32xf32>
    %1 = arith.truncf %0 : vector<16x32xf32> to vector<16x32xbf16>
    %c0_1 = arith.constant 0 : index
    %c0_2 = arith.constant 0 : index
    %2 = vector.load %arg2[%c0_1, %c0_2] : memref<32x96xbf16, #tpu.memory_space<vmem>>, vector<32x96xbf16>
    %cst = arith.constant dense<0.000000e+00> : vector<16x96xf32>
    %3 = tpu.matmul %1, %2, %cst {dimension_numbers = #tpu.dot_dimension_numbers<[1], [0], [0], [1], [0, 0, 1, 1], [], []>} : vector<16x32xbf16>, vector<32x96xbf16>, vector<16x96xf32> -> vector<16x96xf32>
    %4 = vector.extract_strided_slice %3 {offsets = [0, 0], sizes = [16, 32], strides = [1, 1]} : vector<16x96xf32> to vector<16x32xf32>
    %c0_3 = arith.constant 0 : index
    %c0_4 = arith.constant 0 : index
    %c0_5 = arith.constant 0 : index
    %5 = vector.load %arg3[%c0_3, %c0_4, %c0_5] : memref<3x1x32xf32, #tpu.memory_space<vmem>>, vector<1x1x32xf32>
    %6 = vector.shape_cast %5 : vector<1x1x32xf32> to vector<1x32xf32>
    %7 = vector.broadcast %6 : vector<1x32xf32> to vector<16x32xf32>
    %8 = arith.addf %4, %7 : vector<16x32xf32>
    %9 = arith.truncf %8 : vector<16x32xf32> to vector<16x32xbf16>
    %c0_6 = arith.constant 0 : index
    %c0_7 = arith.constant 0 : index
    %c0_8 = arith.constant 0 : index
    %10 = vector.load %arg4[%c0_6, %c0_7, %c0_8] : memref<3x16x32xbf16, #tpu.memory_space<vmem>>, vector<1x16x32xbf16>
    %11 = vector.shape_cast %10 : vector<1x16x32xbf16> to vector<16x32xbf16>
    %12 = vector.shape_cast %9 : vector<16x32xbf16> to vector<1x16x32xbf16>
    tpu.vector_store %arg4[%c0_6, %c0_7, %c0_8], %12 {strides = array<i32>} : memref<3x16x32xbf16, #tpu.memory_space<vmem>>, vector<1x16x32xbf16>,
    %13 = vector.extract_strided_slice %3 {offsets = [0, 32], sizes = [16, 32], strides = [1, 1]} : vector<16x96xf32> to vector<16x32xf32>
    %c1 = arith.constant 1 : index
    %c0_9 = arith.constant 0 : index
    %c0_10 = arith.constant 0 : index
    %14 = vector.load %arg3[%c1, %c0_9, %c0_10] : memref<3x1x32xf32, #tpu.memory_space<vmem>>, vector<1x1x32xf32>
    %15 = vector.shape_cast %14 : vector<1x1x32xf32> to vector<1x32xf32>
    %16 = vector.broadcast %15 : vector<1x32xf32> to vector<16x32xf32>
    %17 = arith.addf %13, %16 : vector<16x32xf32>
    %18 = arith.truncf %17 : vector<16x32xf32> to vector<16x32xbf16>
    %c1_11 = arith.constant 1 : index
    %c0_12 = arith.constant 0 : index
    %c0_13 = arith.constant 0 : index
    %19 = vector.load %arg4[%c1_11, %c0_12, %c0_13] : memref<3x16x32xbf16, #tpu.memory_space<vmem>>, vector<1x16x32xbf16>
    %20 = vector.shape_cast %19 : vector<1x16x32xbf16> to vector<16x32xbf16>
    %21 = vector.shape_cast %18 : vector<16x32xbf16> to vector<1x16x32xbf16>
    tpu.vector_store %arg4[%c1_11, %c0_12, %c0_13], %21 {strides = array<i32>} : memref<3x16x32xbf16, #tpu.memory_space<vmem>>, vector<1x16x32xbf16>,
    %22 = vector.extract_strided_slice %3 {offsets = [0, 64], sizes = [16, 32], strides = [1, 1]} : vector<16x96xf32> to vector<16x32xf32>
    %c2 = arith.constant 2 : index
    %c0_14 = arith.constant 0 : index
    %c0_15 = arith.constant 0 : index
    %23 = vector.load %arg3[%c2, %c0_14, %c0_15] : memref<3x1x32xf32, #tpu.memory_space<vmem>>, vector<1x1x32xf32>
    %24 = vector.shape_cast %23 : vector<1x1x32xf32> to vector<1x32xf32>
    %25 = vector.broadcast %24 : vector<1x32xf32> to vector<16x32xf32>
    %26 = arith.addf %22, %25 : vector<16x32xf32>
    %27 = arith.truncf %26 : vector<16x32xf32> to vector<16x32xbf16>
    %c2_16 = arith.constant 2 : index
    %c0_17 = arith.constant 0 : index
    %c0_18 = arith.constant 0 : index
    %28 = vector.load %arg4[%c2_16, %c0_17, %c0_18] : memref<3x16x32xbf16, #tpu.memory_space<vmem>>, vector<1x16x32xbf16>
    %29 = vector.shape_cast %28 : vector<1x16x32xbf16> to vector<16x32xbf16>
    %30 = vector.shape_cast %27 : vector<16x32xbf16> to vector<1x16x32xbf16>
    tpu.vector_store %arg4[%c2_16, %c0_17, %c0_18], %30 {strides = array<i32>} : memref<3x16x32xbf16, #tpu.memory_space<vmem>>, vector<1x16x32xbf16>,
    return
  }
  func.func @transform_0(%arg0: i32) -> (i32, i32) {
    %c0_i32 = arith.constant 0 : i32
    %c0_i32_0 = arith.constant 0 : i32
    return %arg0, %c0_i32 : i32, i32
  }
  func.func @transform_1(%arg0: i32) -> (i32, i32) {
    %c0_i32 = arith.constant 0 : i32
    %c0_i32_0 = arith.constant 0 : i32
    %c0_i32_1 = arith.constant 0 : i32
    return %c0_i32, %c0_i32_0 : i32, i32
  }
  func.func @transform_2(%arg0: i32) -> (i32, i32, i32) {
    %c0_i32 = arith.constant 0 : i32
    %c0_i32_0 = arith.constant 0 : i32
    %c0_i32_1 = arith.constant 0 : i32
    %c0_i32_2 = arith.constant 0 : i32
    return %c0_i32, %c0_i32_0, %c0_i32_1 : i32, i32, i32
  }
  func.func @transform_3(%arg0: i32) -> (i32, i32, i32) {
    %c0_i32 = arith.constant 0 : i32
    %c0_i32_0 = arith.constant 0 : i32
    %c0_i32_1 = arith.constant 0 : i32
    return %c0_i32, %arg0, %c0_i32_0 : i32, i32, i32
  }
}

</mosaic_0001>

<llo_original>
// kernel: tpu_custom_call.1
$region0: #{tpu_custom_call.1}
  #allocation0 [shape = 'u32[]', space=smem, size = 0x4, offset = 0x4, fixed_abs, tag = 'smem constant byte address 0x4 - core index']
  #allocation1 [shape = 'u32[144,128]{1,0:T(1,128)}', space=vmem, size = 0x12000, scoped, tag = 'internal scratch']
  %s0 = inlined_call_operand.hbm [shape: f32[16,32], index: 0, kind: input, shape index: {}]
  %s1 = inlined_call_operand.hbm [shape: bf16[32,96], index: 1, kind: input, shape index: {}]
  %s2 = inlined_call_operand.vmem [shape: f32[3,1,32], index: 2, kind: input, shape index: {}]
  %s3 = inlined_call_operand.hbm [shape: bf16[3,16,32], index: 3, kind: output, shape index: {}]
  %s4 = sld [smem:[#allocation0]]
  $region30: #{tpu_custom_call.1} parent=0
    _
  %s6 = ssub.s32 1, %s4
  %s7 = scalar_select 0, %s6, %s4
  $region1: #{tpu_custom_call.1} parent=0
    #allocation2 [shape = 'u8[8192]{0}', space=vmem, size = 0x2000, scoped, tag = 'input window, operand 0, single buffered']
    #allocation3 [shape = 's32[1]{0}', space=sflag, size = 0x4, scoped, tag = 'scoped memory for tpu_custom_call.1']
    #allocation4 [shape = 's32[1]{0}', space=sflag, size = 0x4, scoped, tag = 'scoped memory for tpu_custom_call.1']
    #allocation5 [shape = 'u8[8192]{0}', space=vmem, size = 0x2000, scoped, tag = 'input window, operand 1, single buffered']
    #allocation6 [shape = 's32[1]{0}', space=sflag, size = 0x4, scoped, tag = 'scoped memory for tpu_custom_call.1']
    #allocation7 [shape = 'u8[12288]{0}', space=vmem, size = 0x3000, scoped, tag = 'output window, operand 0, single buffered']
    %8 = vsyncpa [#allocation3], 0
    %9 = vsyncpa [#allocation6], 0
    %10 = vsyncpa [#allocation4], 0
    // Predicated region
    $region2: #{tpu_custom_call.1} parent=1 // pred_check
      _
    $region3: #{tpu_custom_call.1} parent=1 // pred_check_branch
      %12 = sbr.rel (0) target = $region5
    $region4: #{tpu_custom_call.1} parent=1 // pred_region
      %s14 = ssub.s32 256, 256
      %15 = vsyncadd [#allocation3], %s14
      %s16 = sshll.u32 [#allocation2], 4
      %s17 = int_to_ptr.vmem [resolvable:$true] %s16
      %22 = dma.hbm_to_vmem [thread:$0]  %s0, 256, %s17, [#allocation3], 128, 128, 8
    $region5: #{tpu_custom_call.1} parent=1 // pred_fallthru
      _
    // Predicated region
    $region6: #{tpu_custom_call.1} parent=1 // pred_check
      _
    $region7: #{tpu_custom_call.1} parent=1 // pred_check_branch
      %24 = sbr.rel (0) target = $region9
    $region8: #{tpu_custom_call.1} parent=1 // pred_region
      %s26 = ssub.s32 256, 256
      %27 = vsyncadd [#allocation6], %s26
      %s28 = sshll.u32 [#allocation5], 4
      %s29 = int_to_ptr.vmem [resolvable:$true] %s28
      %34 = dma.hbm_to_vmem [thread:$0]  %s1, 256, %s29, [#allocation6], 64, 64, 4
    $region9: #{tpu_custom_call.1} parent=1 // pred_fallthru
      _
    // Predicated region
    $region10: #{tpu_custom_call.1} parent=1 // pred_check
      _
    $region11: #{tpu_custom_call.1} parent=1 // pred_check_branch
      %36 = sbr.rel (0) target = $region13
    $region12: #{tpu_custom_call.1} parent=1 // pred_region
      _
    $region13: #{tpu_custom_call.1} parent=1 // pred_fallthru
      _
    // Predicated region
    $region14: #{tpu_custom_call.1} parent=1 // pred_check
      _
    $region15: #{tpu_custom_call.1} parent=1 // pred_check_branch
      %38 = sbr.rel (0) target = $region17
    $region16: #{tpu_custom_call.1} parent=1 // pred_region
      %39 = dma.done [#allocation3], 256
    $region17: #{tpu_custom_call.1} parent=1 // pred_fallthru
      _
    // Predicated region
    $region18: #{tpu_custom_call.1} parent=1 // pred_check
      _
    $region19: #{tpu_custom_call.1} parent=1 // pred_check_branch
      %41 = sbr.rel (0) target = $region21
    $region20: #{tpu_custom_call.1} parent=1 // pred_region
      %42 = dma.done [#allocation6], 256
    $region21: #{tpu_custom_call.1} parent=1 // pred_fallthru
      _
    %v44 = vld [vmem:[#allocation2] sm:$0xff]
    %v45 = vld [vmem:[#allocation2 + $0x8] sm:$0xff]
    %v46 = vpack.c.bf16 %v45, %v44
    %v47 = vld [vmem:[#allocation5] sm:$0xf]
    %v48 = vld [vmem:[#allocation5 + $0x4] sm:$0xf]
    %v49 = vld [vmem:[#allocation5 + $0x8] sm:$0xf]
    %v50 = vld [vmem:[#allocation5 + $0xc] sm:$0xf]
    %v55 = vunpack.c.l.b16 %v47
    %v56 = vunpack.c.l.b16 %v48
    %v57 = vunpack.c.l.b16 %v49
    %v58 = vunpack.c.l.b16 %v50
    %v59 = vpack.c.b16 %v56, %v55
    %v60 = vpack.c.b16 %v58, %v57
    %vm63 = vcmask 261120
    %v65 = vsel %vm63, %v46, 0
    %67 = vmatprep.subr.bf16.mxu0 0
    %68 = vmatpush1.bf16.msra.mxu0 %v59
    %69 = vmatprep.subr.bf16.mxu0 0
    %70 = vmatpush1.bf16.msra.mxu0 %v60
    %71 = vmatprep.subr.bf16.mxu0 0
    %72 = vmatpush1.bf16.msra.mxu0 0
    %73 = vmatprep.subr.bf16.mxu0 0
    %74 = vmatpush1.bf16.msra.mxu0 0
    %75 = vmatprep.subr.bf16.mxu0 0
    %76 = vmatpush1.bf16.msra.mxu0 0
    %77 = vmatprep.subr.bf16.mxu0 0
    %78 = vmatpush1.bf16.msra.mxu0 0
    %79 = vmatprep.subr.bf16.mxu0 0
    %80 = vmatpush1.bf16.msra.mxu0 0
    %81 = vmatprep.subr.bf16.mxu0 0
    %82 = vmatpush1.bf16.msra.mxu0 0
    %83 = vmatprep.subr.bf16.mxu0 0
    %84 = vmatpush1.bf16.msra.mxu0 0
    %85 = vmatprep.subr.bf16.mxu0 0
    %86 = vmatpush1.bf16.msra.mxu0 0
    %87 = vmatprep.subr.bf16.mxu0 0
    %88 = vmatpush1.bf16.msra.mxu0 0
    %89 = vmatprep.subr.bf16.mxu0 0
    %90 = vmatpush1.bf16.msra.mxu0 0
    %91 = vmatprep.subr.bf16.mxu0 0
    %92 = vmatpush1.bf16.msra.mxu0 0
    %93 = vmatprep.subr.bf16.mxu0 0
    %94 = vmatpush1.bf16.msra.mxu0 0
    %95 = vmatprep.subr.bf16.mxu0 0
    %96 = vmatpush1.bf16.msra.mxu0 0
    %97 = vmatprep.subr.bf16.mxu0 0
    %98 = vmatpush1.bf16.msra.mxu0 0
    %99 = vmatprep.mubr.bf16.mxu0 0
    %100 = vmatmul.mubr.bf16.gmra.mrb[0].mxu0 %v65
    %v101 = vpop.f32.mrb[0].mxu0
    %v102 = vadd.f32 0.0, %v101
    %v103 = vpop.f32.mrb[0].mxu0
    %v104 = vpop.f32.mrb[0].mxu0
    %v105 = vadd.f32 0.0, %v104
    %v106 = vpop.f32.mrb[0].mxu0
    %107 = vdwg.mxu0
    %v108 = vld [vmem:[%s2] sm:$0x1]
    %v110 = vlaneseq
    %v111 = vshrl.u32 %v110, 7
    %v112 = vsub.s32 0, %v111
    %v113 = vrot.slane %v108, %v112
    %v115 = vadd.f32 %v102, %v113
    %v116 = vadd.f32 %v105, %v113
    %v117 = vpack.c.bf16 %v116, %v115
    %v119 = vunpack.c.l.b16 %v117
    %v120 = vunpack.c.h.b16 %v117
    %v121 = vpack.c.b16 %v119, %v119
    %v122 = vpack.c.b16 %v120, %v120
    %vm125 = vcmask 257024
    %126 = vst.msk [vmem:[#allocation7] sm:$0xf] %vm125, %v121
    %127 = vst.msk [vmem:[#allocation7 + $0x4] sm:$0xf] %vm125, %v122
    %s128 = scalar_lea.vmem %s2, 1
    %v129 = vld [vmem:[%s128] sm:$0x1]
    %v131 = vlaneseq
    %v132 = vshrl.u32 %v131, 7
    %v133 = vsub.s32 0, %v132
    %v134 = vrot.slane %v129, %v133
    %135 = vrot.lane.b32.xlu0 %v134, 32
    %v136 = vpop.permute.xlu0 %135
    %v138 = vadd.f32 %v102, %v136
    %v139 = vadd.f32 %v105, %v136
    %v140 = vpack.c.bf16 %v139, %v138
    %v142 = vunpack.c.l.b16 %v140
    %v143 = vunpack.c.h.b16 %v140
    %v144 = vpack.c.b16 %v142, %v142
    %v145 = vpack.c.b16 %v143, %v143
    %146 = vrot.lane.b32.xlu0 %v144, 96
    %v147 = vpop.permute.xlu0 %146
    %148 = vrot.lane.b32.xlu0 %v145, 96
    %v149 = vpop.permute.xlu0 %148
    %s152 = scalar_lea.vmem [#allocation7], 8
    %153 = vst.msk [vmem:[%s152] sm:$0xf] %vm125, %v147
    %154 = vst.msk [vmem:[%s152 + $0x4] sm:$0xf] %vm125, %v149
    %s155 = scalar_lea.vmem %s2, 2
    %v156 = vld [vmem:[%s155] sm:$0x1]
    %v158 = vlaneseq
    %v159 = vshrl.u32 %v158, 7
    %v160 = vsub.s32 0, %v159
    %v161 = vrot.slane %v156, %v160
    %162 = vrot.lane.b32.xlu0 %v161, 64
    %v163 = vpop.permute.xlu0 %162
    %v165 = vadd.f32 %v102, %v163
    %v166 = vadd.f32 %v105, %v163
    %v167 = vpack.c.bf16 %v166, %v165
    %v169 = vunpack.c.l.b16 %v167
    %v170 = vunpack.c.h.b16 %v167
    %v171 = vpack.c.b16 %v169, %v169
    %v172 = vpack.c.b16 %v170, %v170
    %173 = vrot.lane.b32.xlu0 %v171, 64
    %v174 = vpop.permute.xlu0 %173
    %175 = vrot.lane.b32.xlu0 %v172, 64
    %v176 = vpop.permute.xlu0 %175
    %s179 = scalar_lea.vmem [#allocation7], 16
    %180 = vst.msk [vmem:[%s179] sm:$0xf] %vm125, %v174
    %181 = vst.msk [vmem:[%s179 + $0x4] sm:$0xf] %vm125, %v176
    // Predicated region
    $region22: #{tpu_custom_call.1} parent=1 // pred_check
      _
    $region23: #{tpu_custom_call.1} parent=1 // pred_check_branch
      %183 = sbr.rel (0) target = $region25
    $region24: #{tpu_custom_call.1} parent=1 // pred_region
      %s185 = ssub.s32 384, 384
      %186 = vsyncadd [#allocation4], %s185
      %s187 = sshll.u32 [#allocation7], 4
      %s188 = int_to_ptr.vmem [resolvable:$true] %s187
      %193 = dma.vmem_to_hbm [thread:$0]  %s188, 384, %s3, [#allocation4], 64, 64, 4
    $region25: #{tpu_custom_call.1} parent=1 // pred_fallthru
      _
    // Predicated region
    $region26: #{tpu_custom_call.1} parent=1 // pred_check
      _
    $region27: #{tpu_custom_call.1} parent=1 // pred_check_branch
      %195 = sbr.rel (0) target = $region29
    $region28: #{tpu_custom_call.1} parent=1 // pred_region
      %196 = dma.done [#allocation4], 384
    $region29: #{tpu_custom_call.1} parent=1 // pred_fallthru
      _
    %197 = vsyncpa [#allocation3], 1
    %198 = vsyncpa [#allocation6], 1
    %199 = vsyncpa [#allocation4], 1

</llo_original>
